<compile_context>
chip_gen: v5e
topology: v5e:2x2
jax: 0.10.0
libtpu: 0.0.40
codegen_flags: <defaults>
</compile_context>

<pallas_src>
import jax
import jax.numpy as jnp
from jax import lax
from jax.experimental import pallas as pl
from jax.experimental.pallas import tpu as pltpu

IN_DIM, H1, H2, OUT_DIM = 20, 16, 8, 4

# Largest-first tile candidates.  8192 rows/step moves ~0.45 MB (bf16 x in +
# f32 probs out) per grid step, comfortably above the ~0.35 us fixed per-step
# overhead, while worst-case VMEM stays ~20 MiB (safe on v7x's 64 MiB; 16384+
# would also fit v5e/v6e's 128 MiB but leaves little headroom on v7x).
_TILE_CANDIDATES = (8192, 4096, 2048, 1024, 512, 256, 128)


def _pick_tile_and_padded_batch(B):
    """Pick (tile_b, padded_B) such that:
       * padded_B is a multiple of 128 (lane width) and of tile_b,
       * the grid has >= 2 steps (keeps both v7x TCs busy, keeps the pipeline
         double-buffered even for exact-fit batches),
       * padding waste is <= 12.5% of the real batch,
       * tile_b is as large as possible (amortizes per-step overhead)."""
    b128 = ((max(B, 1) + 127) // 128) * 128
    for t in _TILE_CANDIDATES:
        steps = -(-b128 // t)
        if steps >= 2 and (steps * t - b128) * 8 <= b128:
            return t, steps * t
    return 128, max(b128, 256)          # tiny batches: 2 steps of 128 rows


def mlp_kernel(x_ref, w1_ref, b1_ref, w2_ref, b2_ref, w3_ref, b3_ref, o_ref):
    x = x_ref[...]                                      # (TB, 20) bf16

    dn_shared_last = (((1,), (1,)), ((), ()))           # contract the shared last dim
    dn_matmul = (((1,), (0,)), ((), ()))                # canonical (M,K)x(K,N)

    # fc1 + ReLU: w1 (16,20) contracted with x (TB,20) on the 20-dim -> (16, TB).
    # bf16 MXU operands, f32 accumulation; bias/ReLU on the VPU in f32.
    h1 = lax.dot_general(w1_ref[...], x, dn_shared_last,
                         precision=lax.Precision.DEFAULT,
                         preferred_element_type=jnp.float32)
    h1 = jnp.maximum(h1 + b1_ref[...], 0.0)             # (16, TB) lane-dense

    # fc2 + ReLU: (8,16) @ (16,TB) -> (8, TB).
    h2 = lax.dot_general(w2_ref[...], h1.astype(jnp.bfloat16), dn_matmul,
                         precision=lax.Precision.DEFAULT,
                         preferred_element_type=jnp.float32)
    h2 = jnp.maximum(h2 + b2_ref[...], 0.0)             # (8, TB) lane-dense

    # fc3: (4,8) @ (8,TB) -> (4, TB) logits; batch on the (dense) lane axis.
    logits = lax.dot_general(w3_ref[...], h2.astype(jnp.bfloat16), dn_matmul,
                             precision=lax.Precision.DEFAULT,
                             preferred_element_type=jnp.float32) + b3_ref[...]

    # Softmax over features (PyTorch dim=1) == sublane axis 0 here.
    m = jnp.max(logits, axis=0, keepdims=True)
    e = jnp.exp(logits - m)
    probs_t = e / jnp.sum(e, axis=0, keepdims=True)     # exact norm: rows sum to 1

    # Transpose (4, TB) -> (TB, 4) in-kernel (XLU slot) so the HBM output is
    # already (B, 4) and no separate XLA transpose pass over the result exists.
    o_ref[...] = probs_t.T.astype(o_ref.dtype)


def prepare_params(params):
    """One-time layout/dtype prep hoisted out of the forward path:
    weights -> bf16 in their native PyTorch (out, in) layout (single-pass MXU
    operands, no transposes), biases -> f32 columns (out, 1) that broadcast
    against the transposed (out, TILE_B) activations."""
    (w1, b1), (w2, b2), (w3, b3) = params
    return (w1.astype(jnp.bfloat16), b1.astype(jnp.float32)[:, None],
            w2.astype(jnp.bfloat16), b2.astype(jnp.float32)[:, None],
            w3.astype(jnp.bfloat16), b3.astype(jnp.float32)[:, None])


@jax.jit
def mlp_forward(x, prepared):
    w1, b1c, w2, b2c, w3, b3c = prepared
    B = x.shape[0]
    tile_b, b_pad = _pick_tile_and_padded_batch(B)

    # bf16 input (x is ~70% of the per-row HBM bytes); MXU still accumulates
    # in f32.  Cast + pad fuse into one small XLA op ahead of the kernel.
    xb = x.astype(jnp.bfloat16)
    if b_pad != B:
        xb = jnp.pad(xb, ((0, b_pad - B), (0, 0)))

    def pinned(shape):
        # Same block every grid step -> DMA'd once, VMEM-resident across steps.
        return pl.BlockSpec(shape, lambda i: (0, 0))

    out = pl.pallas_call(
        mlp_kernel,
        out_shape=jax.ShapeDtypeStruct((b_pad, OUT_DIM), jnp.float32),
        grid_spec=pltpu.PrefetchScalarGridSpec(
            num_scalar_prefetch=0,
            grid=(b_pad // tile_b,),
            in_specs=[
                pl.BlockSpec((tile_b, IN_DIM), lambda i: (i, 0)),   # x: batch-tiled
                pinned((H1, IN_DIM)), pinned((H1, 1)),              # w1, b1
                pinned((H2, H1)),     pinned((H2, 1)),              # w2, b2
                pinned((OUT_DIM, H2)), pinned((OUT_DIM, 1)),        # w3, b3
            ],
            out_specs=pl.BlockSpec((tile_b, OUT_DIM), lambda i: (i, 0)),
        ),
        compiler_params=pltpu.CompilerParams(
            dimension_semantics=("parallel",),        # megacore / v7x 2-TC sharding
            vmem_limit_bytes=40 * 1024 * 1024,        # ~20 MiB worst case at 8192 rows
        ),
    )(xb, w1, b1c, w2, b2c, w3, b3c)

    return out[:B] if b_pad != B else out


def init_params(key):
    """Deterministic init matching nn.Linear shapes: (out, in) weights, (out,) bias."""
    dims = [(H1, IN_DIM), (H2, H1), (OUT_DIM, H2)]
    params = []
    for i, (out_d, in_d) in enumerate(dims):
        kw, kb, key = jax.random.split(jax.random.fold_in(key, i), 3)
        bound = 1.0 / jnp.sqrt(in_d)
        w = jax.random.uniform(kw, (out_d, in_d), jnp.float32, -bound, bound)
        b = jax.random.uniform(kb, (out_d,), jnp.float32, -bound, bound)
        params.append((w, b))
    return params


def reference_forward(x, params, compute_dtype=jnp.float32):
    """Pure-JAX reference.  compute_dtype=bf16 reproduces the kernel's explicit
    precision choice (bf16 matmul operands, f32 accumulation / elementwise)."""
    (w1, b1), (w2, b2), (w3, b3) = params
    c = lambda a: a.astype(compute_dtype)
    h = jnp.maximum(jnp.dot(c(x), c(w1).T, preferred_element_type=jnp.float32) + b1, 0.0)
    h = jnp.maximum(jnp.dot(c(h), c(w2).T, preferred_element_type=jnp.float32) + b2, 0.0)
    logits = jnp.dot(c(h), c(w3).T, preferred_element_type=jnp.float32) + b3
    return jax.nn.softmax(logits, axis=1)


if __name__ == "__main__":
    key = jax.random.PRNGKey(0)
    params = init_params(key)
    prepared = prepare_params(params)      # layout/dtype prep done once, not per call

    # B=8 exercises the tiny/ragged path (padded to 256 -> 2 grid steps of 128);
    # B=1000 exercises a larger tile (512), multi-step pinned-weight revisiting,
    # and the padded-batch slice-back.
    for B in (8, 1000):
        x = jax.random.normal(jax.random.fold_in(key, 100 + B), (B, IN_DIM), jnp.float32)
        out = mlp_forward(x, prepared)
        jax.block_until_ready(out)

        assert out.shape == (B, OUT_DIM)

        # Tight check vs. a precision-matched (bf16-operand) reference.
        ref_bf = reference_forward(x, params, compute_dtype=jnp.bfloat16)
        assert jnp.allclose(out, ref_bf, atol=2e-3), "mismatch vs bf16-matched reference"

        # Loose check vs. the full-f32 reference: bounds the deliberate bf16
        # input/weight trade-off.  Real layout/indexing bugs produce O(0.1+) errors.
        ref_f32 = reference_forward(x, params)
        assert jnp.allclose(out, ref_f32, atol=2e-2), "mismatch vs f32 reference"

        # Exact f32 normalization in the kernel -> rows sum to 1 to f32 rounding.
        assert jnp.allclose(out.sum(axis=1), 1.0, atol=1e-4), "softmax rows must sum to 1"

    print("KERNEL_OK")
</pallas_src>

<mosaic_0001>
module attributes {stable_mosaic.version = 11 : i64} {
  func.func @mlp_kernel(%arg0: i32, %arg1: memref<128x20xbf16, #tpu.memory_space<vmem>>, %arg2: memref<16x20xbf16, #tpu.memory_space<vmem>>, %arg3: memref<16x1xf32, #tpu.memory_space<vmem>>, %arg4: memref<8x16xbf16, #tpu.memory_space<vmem>>, %arg5: memref<8x1xf32, #tpu.memory_space<vmem>>, %arg6: memref<4x8xbf16, #tpu.memory_space<vmem>>, %arg7: memref<4x1xf32, #tpu.memory_space<vmem>>, %arg8: memref<128x4xf32, #tpu.memory_space<vmem>>) attributes {dimension_semantics = [#tpu.dimension_semantics<parallel>], iteration_bounds = array<i64: 2>, scalar_prefetch = 0 : i64, scratch_operands = 0 : i64, tpu.core_type = #tpu.core_type<tc>, window_params = [{transform_indices = @transform_0, window_bounds = array<i64: 128, 20>}, {pipeline_mode = #tpu.pipeline_mode<synchronous>, transform_indices = @transform_1, window_bounds = array<i64: 16, 20>}, {pipeline_mode = #tpu.pipeline_mode<synchronous>, transform_indices = @transform_2, window_bounds = array<i64: 16, 1>}, {pipeline_mode = #tpu.pipeline_mode<synchronous>, transform_indices = @transform_3, window_bounds = array<i64: 8, 16>}, {pipeline_mode = #tpu.pipeline_mode<synchronous>, transform_indices = @transform_4, window_bounds = array<i64: 8, 1>}, {pipeline_mode = #tpu.pipeline_mode<synchronous>, transform_indices = @transform_5, window_bounds = array<i64: 4, 8>}, {pipeline_mode = #tpu.pipeline_mode<synchronous>, transform_indices = @transform_6, window_bounds = array<i64: 4, 1>}, {transform_indices = @transform_7, window_bounds = array<i64: 128, 4>}]} {
    %c0 = arith.constant 0 : index
    %c0_0 = arith.constant 0 : index
    %0 = vector.load %arg1[%c0, %c0_0] : memref<128x20xbf16, #tpu.memory_space<vmem>>, vector<128x20xbf16>
    %c0_1 = arith.constant 0 : index
    %c0_2 = arith.constant 0 : index
    %1 = vector.load %arg2[%c0_1, %c0_2] : memref<16x20xbf16, #tpu.memory_space<vmem>>, vector<16x20xbf16>
    %cst = arith.constant dense<0.000000e+00> : vector<16x128xf32>
    %2 = tpu.matmul %1, %0, %cst {dimension_numbers = #tpu.dot_dimension_numbers<[1], [1], [0], [0], [0, 0, 1, 0], [], []>} : vector<16x20xbf16>, vector<128x20xbf16>, vector<16x128xf32> -> vector<16x128xf32>
    %c0_3 = arith.constant 0 : index
    %c0_4 = arith.constant 0 : index
    %3 = vector.load %arg3[%c0_3, %c0_4] : memref<16x1xf32, #tpu.memory_space<vmem>>, vector<16x1xf32>
    %4 = vector.broadcast %3 : vector<16x1xf32> to vector<16x128xf32>
    %5 = arith.addf %2, %4 : vector<16x128xf32>
    %cst_5 = arith.constant 0.000000e+00 : f32
    %6 = vector.broadcast %cst_5 : f32 to vector<16x128xf32>
    %7 = arith.maximumf %5, %6 : vector<16x128xf32>
    %c0_6 = arith.constant 0 : index
    %c0_7 = arith.constant 0 : index
    %8 = vector.load %arg4[%c0_6, %c0_7] : memref<8x16xbf16, #tpu.memory_space<vmem>>, vector<8x16xbf16>
    %9 = arith.truncf %7 : vector<16x128xf32> to vector<16x128xbf16>
    %cst_8 = arith.constant dense<0.000000e+00> : vector<8x128xf32>
    %10 = tpu.matmul %8, %9, %cst_8 {dimension_numbers = #tpu.dot_dimension_numbers<[1], [0], [0], [1], [0, 0, 1, 1], [], []>} : vector<8x16xbf16>, vector<16x128xbf16>, vector<8x128xf32> -> vector<8x128xf32>
    %c0_9 = arith.constant 0 : index
    %c0_10 = arith.constant 0 : index
    %11 = vector.load %arg5[%c0_9, %c0_10] : memref<8x1xf32, #tpu.memory_space<vmem>>, vector<8x1xf32>
    %12 = vector.broadcast %11 : vector<8x1xf32> to vector<8x128xf32>
    %13 = arith.addf %10, %12 : vector<8x128xf32>
    %cst_11 = arith.constant 0.000000e+00 : f32
    %14 = vector.broadcast %cst_11 : f32 to vector<8x128xf32>
    %15 = arith.maximumf %13, %14 : vector<8x128xf32>
    %c0_12 = arith.constant 0 : index
    %c0_13 = arith.constant 0 : index
    %16 = vector.load %arg6[%c0_12, %c0_13] : memref<4x8xbf16, #tpu.memory_space<vmem>>, vector<4x8xbf16>
    %17 = arith.truncf %15 : vector<8x128xf32> to vector<8x128xbf16>
    %cst_14 = arith.constant dense<0.000000e+00> : vector<4x128xf32>
    %18 = tpu.matmul %16, %17, %cst_14 {dimension_numbers = #tpu.dot_dimension_numbers<[1], [0], [0], [1], [0, 0, 1, 1], [], []>} : vector<4x8xbf16>, vector<8x128xbf16>, vector<4x128xf32> -> vector<4x128xf32>
    %c0_15 = arith.constant 0 : index
    %c0_16 = arith.constant 0 : index
    %19 = vector.load %arg7[%c0_15, %c0_16] : memref<4x1xf32, #tpu.memory_space<vmem>>, vector<4x1xf32>
    %20 = vector.broadcast %19 : vector<4x1xf32> to vector<4x128xf32>
    %21 = arith.addf %18, %20 : vector<4x128xf32>
    %cst_17 = arith.constant dense<0xFF800000> : vector<128xf32>
    %22 = vector.multi_reduction <maximumf>, %21, %cst_17 [0] : vector<4x128xf32> to vector<128xf32>
    %23 = vector.shape_cast %22 : vector<128xf32> to vector<1x128xf32>
    %24 = vector.broadcast %23 : vector<1x128xf32> to vector<4x128xf32>
    %25 = arith.subf %21, %24 : vector<4x128xf32>
    %26 = math.exp %25 : vector<4x128xf32>
    %cst_18 = arith.constant dense<0.000000e+00> : vector<128xf32>
    %27 = vector.multi_reduction <add>, %26, %cst_18 [0] : vector<4x128xf32> to vector<128xf32>
    %28 = vector.shape_cast %27 : vector<128xf32> to vector<1x128xf32>
    %29 = vector.broadcast %28 : vector<1x128xf32> to vector<4x128xf32>
    %30 = arith.divf %26, %29 : vector<4x128xf32>
    %31 = tpu.transpose %30, [1, 0] : vector<4x128xf32> -> vector<128x4xf32>
    %c0_19 = arith.constant 0 : index
    %c0_20 = arith.constant 0 : index
    %32 = vector.load %arg8[%c0_19, %c0_20] : memref<128x4xf32, #tpu.memory_space<vmem>>, vector<128x4xf32>
    tpu.vector_store %arg8[%c0_19, %c0_20], %31 {strides = array<i32>} : memref<128x4xf32, #tpu.memory_space<vmem>>, vector<128x4xf32>,
    return
  }
  func.func @transform_0(%arg0: i32) -> (i32, i32) {
    %c0_i32 = arith.constant 0 : i32
    %c0_i32_0 = arith.constant 0 : i32
    return %arg0, %c0_i32 : i32, i32
  }
  func.func @transform_1(%arg0: i32) -> (i32, i32) {
    %c0_i32 = arith.constant 0 : i32
    %c0_i32_0 = arith.constant 0 : i32
    %c0_i32_1 = arith.constant 0 : i32
    return %c0_i32, %c0_i32_0 : i32, i32
  }
  func.func @transform_2(%arg0: i32) -> (i32, i32) {
    %c0_i32 = arith.constant 0 : i32
    %c0_i32_0 = arith.constant 0 : i32
    %c0_i32_1 = arith.constant 0 : i32
    return %c0_i32, %c0_i32_0 : i32, i32
  }
  func.func @transform_3(%arg0: i32) -> (i32, i32) {
    %c0_i32 = arith.constant 0 : i32
    %c0_i32_0 = arith.constant 0 : i32
    %c0_i32_1 = arith.constant 0 : i32
    return %c0_i32, %c0_i32_0 : i32, i32
  }
  func.func @transform_4(%arg0: i32) -> (i32, i32) {
    %c0_i32 = arith.constant 0 : i32
    %c0_i32_0 = arith.constant 0 : i32
    %c0_i32_1 = arith.constant 0 : i32
    return %c0_i32, %c0_i32_0 : i32, i32
  }
  func.func @transform_5(%arg0: i32) -> (i32, i32) {
    %c0_i32 = arith.constant 0 : i32
    %c0_i32_0 = arith.constant 0 : i32
    %c0_i32_1 = arith.constant 0 : i32
    return %c0_i32, %c0_i32_0 : i32, i32
  }
  func.func @transform_6(%arg0: i32) -> (i32, i32) {
    %c0_i32 = arith.constant 0 : i32
    %c0_i32_0 = arith.constant 0 : i32
    %c0_i32_1 = arith.constant 0 : i32
    return %c0_i32, %c0_i32_0 : i32, i32
  }
  func.func @transform_7(%arg0: i32) -> (i32, i32) {
    %c0_i32 = arith.constant 0 : i32
    %c0_i32_0 = arith.constant 0 : i32
    return %arg0, %c0_i32 : i32, i32
  }
}

</mosaic_0001>

<llo_original>
// kernel: mlp_forward.1
$region0: #{mlp_forward.1}
  #allocation0 [shape = 'u32[]', space=smem, size = 0x4, offset = 0x4, fixed_abs, tag = 'smem constant byte address 0x4 - core index']
  #allocation1 [shape = 'u32[72,128]{1,0:T(1,128)}', space=vmem, size = 0x9000, scoped, tag = 'internal scratch']
  %s0 = inlined_call_operand.vmem [shape: bf16[256,20], index: 0, kind: input, shape index: {}]
  %s1 = inlined_call_operand.vmem [shape: bf16[16,20], index: 1, kind: input, shape index: {}]
  %s2 = inlined_call_operand.vmem [shape: f32[16,1], index: 2, kind: input, shape index: {}]
  %s3 = inlined_call_operand.vmem [shape: bf16[8,16], index: 3, kind: input, shape index: {}]
  %s4 = inlined_call_operand.vmem [shape: f32[8,1], index: 4, kind: input, shape index: {}]
  %s5 = inlined_call_operand.vmem [shape: bf16[4,8], index: 5, kind: input, shape index: {}]
  %s6 = inlined_call_operand.vmem [shape: f32[4,1], index: 6, kind: input, shape index: {}]
  %s7 = inlined_call_operand.vmem [shape: f32[256,4], index: 7, kind: output, shape index: {}]
  %s8 = sld [smem:[#allocation0]]
  $region61: #{mlp_forward.1} parent=0
    _
  %s10 = ssub.s32 1, %s8
  %s11 = scalar_select 0, %s10, %s8
  loop: start=0, step=1, limit=4
  $region2: #{mlp_forward.1} parent=0 // loop_pre_header
    _
  $region3: #{mlp_forward.1} parent=0 // loop_header
    %s13 = sphi 0, %s17
    %p14 = scmp.ge.s32.totalorder %s13, 4
    %s23 = sphi 0, %s25
    %s26 = sphi 0, %s23
    %s27 = sphi 0, %s26
    %s43 = sphi 0, %s27
    %s47 = sphi 0, %s47
    %s49 = sphi 0, %s47
    %s50 = sphi 0, %s49
    %s64 = sphi 0, %s50
    %s68 = sphi 0, %s68
    %s70 = sphi 0, %s68
    %s71 = sphi 0, %s70
    %s85 = sphi 0, %s71
    %s89 = sphi 0, %s89
    %s91 = sphi 0, %s89
    %s92 = sphi 0, %s91
    %s106 = sphi 0, %s92
    %s110 = sphi 0, %s110
    %s112 = sphi 0, %s110
    %s113 = sphi 0, %s112
    %s127 = sphi 0, %s113
    %s131 = sphi 0, %s131
    %s133 = sphi 0, %s131
    %s134 = sphi 0, %s133
    %s148 = sphi 0, %s134
    %s152 = sphi 0, %s152
    %s154 = sphi 0, %s152
    %s155 = sphi 0, %s154
    %s169 = sphi 0, %s155
    %s175 = sphi 0, %s177
    %s178 = sphi 0, %s175
    %s179 = sphi 0, %s178
    %s195 = sphi 0, %s179
  $region4: #{mlp_forward.1} parent=0 // loop_header_branch
    %16 = sbr.rel (%p14) target = $region8
  $region5: #{mlp_forward.1} parent=0 // loop_body
    %s18 = ssub.s32 %s13, 1
    %s19 = ssub.s32 %s13, 2
    %s20 = sadd.s32 %s13, 1
    %s21 = ssub.s32 %s13, %s20
    %p22 = scmp.eq.s32.totalorder %s21, 0
    %s24 = sadd.s32 %s23, 1
    %s25 = scalar_select %p22, %s23, %s24
    %p28 = pneg %p22
    %p29 = scmp.eq.s32.totalorder %s13, 1
    %p30 = por %p28, %p29
    %p31 = scmp.ne.s32.totalorder %s23, %s26
    %p32 = scmp.eq.s32.totalorder %s13, 0
    %p33 = por %p31, %p32
    %p34 = scmp.ne.s32.totalorder %s23, %s26
    %p35 = scmp.eq.s32.totalorder %s18, 1
    %p36 = por %p34, %p35
    %p37 = scmp.ne.s32.totalorder %s26, %s27
    %p38 = scmp.eq.s32.totalorder %s18, 0
    %p39 = por %p37, %p38
    %p40 = scmp.ne.s32.totalorder %s26, %s27
    %p41 = scmp.eq.s32.totalorder %s19, 1
    %p42 = por %p40, %p41
    %p44 = scmp.ne.s32.totalorder %s27, %s43
    %p45 = scmp.eq.s32.totalorder %s19, 0
    %p46 = por %p44, %p45
    %s48 = sadd.s32 %s47, 1
    %p51 = scmp.eq.s32.totalorder %s13, 1
    %p52 = scmp.ne.s32.totalorder %s47, %s49
    %p53 = scmp.eq.s32.totalorder %s13, 0
    %p54 = por %p52, %p53
    %p55 = scmp.ne.s32.totalorder %s47, %s49
    %p56 = scmp.eq.s32.totalorder %s18, 1
    %p57 = por %p55, %p56
    %p58 = scmp.ne.s32.totalorder %s49, %s50
    %p59 = scmp.eq.s32.totalorder %s18, 0
    %p60 = por %p58, %p59
    %p61 = scmp.ne.s32.totalorder %s49, %s50
    %p62 = scmp.eq.s32.totalorder %s19, 1
    %p63 = por %p61, %p62
    %p65 = scmp.ne.s32.totalorder %s50, %s64
    %p66 = scmp.eq.s32.totalorder %s19, 0
    %p67 = por %p65, %p66
    %s69 = sadd.s32 %s68, 1
    %p72 = scmp.eq.s32.totalorder %s13, 1
    %p73 = scmp.ne.s32.totalorder %s68, %s70
    %p74 = scmp.eq.s32.totalorder %s13, 0
    %p75 = por %p73, %p74
    %p76 = scmp.ne.s32.totalorder %s68, %s70
    %p77 = scmp.eq.s32.totalorder %s18, 1
    %p78 = por %p76, %p77
    %p79 = scmp.ne.s32.totalorder %s70, %s71
    %p80 = scmp.eq.s32.totalorder %s18, 0
    %p81 = por %p79, %p80
    %p82 = scmp.ne.s32.totalorder %s70, %s71
    %p83 = scmp.eq.s32.totalorder %s19, 1
    %p84 = por %p82, %p83
    %p86 = scmp.ne.s32.totalorder %s71, %s85
    %p87 = scmp.eq.s32.totalorder %s19, 0
    %p88 = por %p86, %p87
    %s90 = sadd.s32 %s89, 1
    %p93 = scmp.eq.s32.totalorder %s13, 1
    %p94 = scmp.ne.s32.totalorder %s89, %s91
    %p95 = scmp.eq.s32.totalorder %s13, 0
    %p96 = por %p94, %p95
    %p97 = scmp.ne.s32.totalorder %s89, %s91
    %p98 = scmp.eq.s32.totalorder %s18, 1
    %p99 = por %p97, %p98
    %p100 = scmp.ne.s32.totalorder %s91, %s92
    %p101 = scmp.eq.s32.totalorder %s18, 0
    %p102 = por %p100, %p101
    %p103 = scmp.ne.s32.totalorder %s91, %s92
    %p104 = scmp.eq.s32.totalorder %s19, 1
    %p105 = por %p103, %p104
    %p107 = scmp.ne.s32.totalorder %s92, %s106
    %p108 = scmp.eq.s32.totalorder %s19, 0
    %p109 = por %p107, %p108
    %s111 = sadd.s32 %s110, 1
    %p114 = scmp.eq.s32.totalorder %s13, 1
    %p115 = scmp.ne.s32.totalorder %s110, %s112
    %p116 = scmp.eq.s32.totalorder %s13, 0
    %p117 = por %p115, %p116
    %p118 = scmp.ne.s32.totalorder %s110, %s112
    %p119 = scmp.eq.s32.totalorder %s18, 1
    %p120 = por %p118, %p119
    %p121 = scmp.ne.s32.totalorder %s112, %s113
    %p122 = scmp.eq.s32.totalorder %s18, 0
    %p123 = por %p121, %p122
    %p124 = scmp.ne.s32.totalorder %s112, %s113
    %p125 = scmp.eq.s32.totalorder %s19, 1
    %p126 = por %p124, %p125
    %p128 = scmp.ne.s32.totalorder %s113, %s127
    %p129 = scmp.eq.s32.totalorder %s19, 0
    %p130 = por %p128, %p129
    %s132 = sadd.s32 %s131, 1
    %p135 = scmp.eq.s32.totalorder %s13, 1
    %p136 = scmp.ne.s32.totalorder %s131, %s133
    %p137 = scmp.eq.s32.totalorder %s13, 0
    %p138 = por %p136, %p137
    %p139 = scmp.ne.s32.totalorder %s131, %s133
    %p140 = scmp.eq.s32.totalorder %s18, 1
    %p141 = por %p139, %p140
    %p142 = scmp.ne.s32.totalorder %s133, %s134
    %p143 = scmp.eq.s32.totalorder %s18, 0
    %p144 = por %p142, %p143
    %p145 = scmp.ne.s32.totalorder %s133, %s134
    %p146 = scmp.eq.s32.totalorder %s19, 1
    %p147 = por %p145, %p146
    %p149 = scmp.ne.s32.totalorder %s134, %s148
    %p150 = scmp.eq.s32.totalorder %s19, 0
    %p151 = por %p149, %p150
    %s153 = sadd.s32 %s152, 1
    %p156 = scmp.eq.s32.totalorder %s13, 1
    %p157 = scmp.ne.s32.totalorder %s152, %s154
    %p158 = scmp.eq.s32.totalorder %s13, 0
    %p159 = por %p157, %p158
    %p160 = scmp.ne.s32.totalorder %s152, %s154
    %p161 = scmp.eq.s32.totalorder %s18, 1
    %p162 = por %p160, %p161
    %p163 = scmp.ne.s32.totalorder %s154, %s155
    %p164 = scmp.eq.s32.totalorder %s18, 0
    %p165 = por %p163, %p164
    %p166 = scmp.ne.s32.totalorder %s154, %s155
    %p167 = scmp.eq.s32.totalorder %s19, 1
    %p168 = por %p166, %p167
    %p170 = scmp.ne.s32.totalorder %s155, %s169
    %p171 = scmp.eq.s32.totalorder %s19, 0
    %p172 = por %p170, %p171
    %s173 = ssub.s32 %s13, %s20
    %p174 = scmp.eq.s32.totalorder %s173, 0
    %s176 = sadd.s32 %s175, 1
    %s177 = scalar_select %p174, %s175, %s176
    %p180 = pneg %p174
    %p181 = scmp.eq.s32.totalorder %s13, 1
    %p182 = por %p180, %p181
    %p183 = scmp.ne.s32.totalorder %s175, %s178
    %p184 = scmp.eq.s32.totalorder %s13, 0
    %p185 = por %p183, %p184
    %p186 = scmp.ne.s32.totalorder %s175, %s178
    %p187 = scmp.eq.s32.totalorder %s18, 1
    %p188 = por %p186, %p187
    %p189 = scmp.ne.s32.totalorder %s178, %s179
    %p190 = scmp.eq.s32.totalorder %s18, 0
    %p191 = por %p189, %p190
    %p192 = scmp.ne.s32.totalorder %s178, %s179
    %p193 = scmp.eq.s32.totalorder %s19, 1
    %p194 = por %p192, %p193
    %p196 = scmp.ne.s32.totalorder %s179, %s195
    %p197 = scmp.eq.s32.totalorder %s19, 0
    %p198 = por %p196, %p197
    %p199 = scmp.le.s32.totalorder 1, %s13
    %p200 = scmp.lt.s32.totalorder %s13, 3
    %p201 = pnand %p199, %p200
    %p202 = pneg %p201
    // Predicated region
    $region9: #{mlp_forward.1} parent=5 // pred_check
      _
    $region10: #{mlp_forward.1} parent=5 // pred_check_branch
      %204 = sbr.rel (%p201) target = $region12
    $region11: #{mlp_forward.1} parent=5 // pred_region
      %s205 = ssub.s32 %s13, 1
      // Predicated region
      $region13: #{mlp_forward.1} parent=11 // pred_check
        %p206 = pneg %p60
      $region14: #{mlp_forward.1} parent=11 // pred_check_branch
        %208 = sbr.rel (%p206) target = $region16
      $region15: #{mlp_forward.1} parent=11 // pred_region
        _
      $region16: #{mlp_forward.1} parent=11 // pred_fallthru
        _
      // Predicated region
      $region17: #{mlp_forward.1} parent=11 // pred_check
        %p209 = pneg %p81
      $region18: #{mlp_forward.1} parent=11 // pred_check_branch
        %211 = sbr.rel (%p209) target = $region20
      $region19: #{mlp_forward.1} parent=11 // pred_region
        _
      $region20: #{mlp_forward.1} parent=11 // pred_fallthru
        _
      // Predicated region
      $region21: #{mlp_forward.1} parent=11 // pred_check
        %p212 = pneg %p102
      $region22: #{mlp_forward.1} parent=11 // pred_check_branch
        %214 = sbr.rel (%p212) target = $region24
      $region23: #{mlp_forward.1} parent=11 // pred_region
        _
      $region24: #{mlp_forward.1} parent=11 // pred_fallthru
        _
      // Predicated region
      $region25: #{mlp_forward.1} parent=11 // pred_check
        %p215 = pneg %p123
      $region26: #{mlp_forward.1} parent=11 // pred_check_branch
        %217 = sbr.rel (%p215) target = $region28
      $region27: #{mlp_forward.1} parent=11 // pred_region
        _
      $region28: #{mlp_forward.1} parent=11 // pred_fallthru
        _
      // Predicated region
      $region29: #{mlp_forward.1} parent=11 // pred_check
        %p218 = pneg %p144
      $region30: #{mlp_forward.1} parent=11 // pred_check_branch
        %220 = sbr.rel (%p218) target = $region32
      $region31: #{mlp_forward.1} parent=11 // pred_region
        _
      $region32: #{mlp_forward.1} parent=11 // pred_fallthru
        _
      // Predicated region
      $region33: #{mlp_forward.1} parent=11 // pred_check
        %p221 = pneg %p165
      $region34: #{mlp_forward.1} parent=11 // pred_check_branch
        %223 = sbr.rel (%p221) target = $region36
      $region35: #{mlp_forward.1} parent=11 // pred_region
        _
      $region36: #{mlp_forward.1} parent=11 // pred_fallthru
        _
    $region12: #{mlp_forward.1} parent=5 // pred_fallthru
      _
    %p224 = scmp.lt.s32.totalorder %s13, 2
    // Predicated region
    $region37: #{mlp_forward.1} parent=5 // pred_check
      %p225 = pneg %p224
    $region38: #{mlp_forward.1} parent=5 // pred_check_branch
      %227 = sbr.rel (%p225) target = $region40
    $region39: #{mlp_forward.1} parent=5 // pred_region
      // Predicated region
      $region41: #{mlp_forward.1} parent=39 // pred_check
        %p228 = pneg %p33
      $region42: #{mlp_forward.1} parent=39 // pred_check_branch
        %230 = sbr.rel (%p228) target = $region44
      $region43: #{mlp_forward.1} parent=39 // pred_region
        %s231 = smul.u32 16, %s13
        %p232 = scmp.lt.s32.totalorder %s231, 31
        %s233 = scalar_select %p232, %s231, 31
        %s234 = smul.addr %s233, 4
        %s235 = scalar_lea.vmem %s0, %s234
        %s236 = smul.u32 16, %s13
      $region44: #{mlp_forward.1} parent=39 // pred_fallthru
        _
    $region40: #{mlp_forward.1} parent=5 // pred_fallthru
      _
    %p237 = scmp.le.s32.totalorder 1, %s13
    %p238 = scmp.lt.s32.totalorder %s13, 3
    %p239 = pnand %p237, %p238
    %p240 = pneg %p239
    // Predicated region
    $region45: #{mlp_forward.1} parent=5 // pred_check
      _
    $region46: #{mlp_forward.1} parent=5 // pred_check_branch
      %242 = sbr.rel (%p239) target = $region48
    $region47: #{mlp_forward.1} parent=5 // pred_region
      %s243 = ssub.s32 %s13, 1
      %s244 = smul.u32 16, %s18
      %p245 = scmp.lt.s32.totalorder %s244, 31
      %s246 = scalar_select %p245, %s244, 31
      %s247 = smul.addr %s246, 4
      %s248 = scalar_lea.vmem %s0, %s247
      %p249 = pneg %p39
      %p250 = pneg %p36
      %p251 = pneg %p60
      %p252 = pneg %p57
      %p253 = pneg %p81
      %p254 = pneg %p78
      %p255 = pneg %p102
      %p256 = pneg %p99
      %p257 = pneg %p123
      %p258 = pneg %p120
      %p259 = pneg %p144
      %p260 = pneg %p141
      %p261 = pneg %p165
      %p262 = pneg %p162
      %p263 = pneg %p191
      %p264 = pneg %p188
      %s265 = smul.u32 16, %s18
      %p266 = scmp.lt.s32.totalorder %s265, 31
      %s267 = scalar_select %p266, %s265, 31
      %s268 = smul.addr %s267, 8
      %s269 = scalar_lea.vmem %s7, %s268
      %s270 = smul.u32 16, %s18
      %p271 = scmp.lt.s32.totalorder %s270, 31
      %s272 = scalar_select %p271, %s270, 31
      %s273 = smul.addr %s272, 4
      %s274 = scalar_lea.vmem %s0, %s273
      %s275 = smul.u32 16, %s18
      %s276 = smul.u32 16, %s18
      %p277 = scmp.lt.s32.totalorder %s276, 31
      %s278 = scalar_select %p277, %s276, 31
      %s279 = smul.addr %s278, 8
      %s280 = scalar_lea.vmem %s7, %s279
      %s281 = smul.u32 16, %s18
      %v283 = vld [vmem:[%s274] sm:$0xf]
      %v284 = vld [vmem:[%s274 + $0x4] sm:$0xf]
      %v285 = vld [vmem:[%s274 + $0x8] sm:$0xf]
      %v286 = vld [vmem:[%s274 + $0xc] sm:$0xf]
      %v287 = vld [vmem:[%s274 + $0x10] sm:$0xf]
      %v288 = vld [vmem:[%s274 + $0x14] sm:$0xf]
      %v289 = vld [vmem:[%s274 + $0x18] sm:$0xf]
      %v290 = vld [vmem:[%s274 + $0x1c] sm:$0xf]
      %v291 = vld [vmem:[%s274 + $0x20] sm:$0xf]
      %v292 = vld [vmem:[%s274 + $0x24] sm:$0xf]
      %v293 = vld [vmem:[%s274 + $0x28] sm:$0xf]
      %v294 = vld [vmem:[%s274 + $0x2c] sm:$0xf]
      %v295 = vld [vmem:[%s274 + $0x30] sm:$0xf]
      %v296 = vld [vmem:[%s274 + $0x34] sm:$0xf]
      %v297 = vld [vmem:[%s274 + $0x38] sm:$0xf]
      %v298 = vld [vmem:[%s274 + $0x3c] sm:$0xf]
      %v299 = vld [vmem:[%s1] sm:$0xf]
      %v300 = vld [vmem:[%s1 + $0x4] sm:$0xf]
      %v301 = vld [vmem:[%s2] sm:$0xff]
      %v302 = vld [vmem:[%s2 + $0x8] sm:$0xff]
      %304 = vset.pattern.permute.xlu0 0
      %305 = vperm.xlu0 %304, %v301
      %v306 = vpop.permute.xlu0 %305
      %309 = vset.pattern.permute.xlu0 0
      %310 = vperm.xlu0 %309, %v302
      %v311 = vpop.permute.xlu0 %310
      %v315 = vunpack.c.l.b16 %v299
      %v316 = vunpack.c.l.b16 %v300
      %v317 = vpack.c.b16 %v316, %v315
      %v334 = vunpack.c.l.b16 %v283
      %v335 = vunpack.c.l.b16 %v284
      %v336 = vunpack.c.l.b16 %v285
      %v337 = vunpack.c.l.b16 %v286
      %v338 = vunpack.c.l.b16 %v287
      %v339 = vunpack.c.l.b16 %v288
      %v340 = vunpack.c.l.b16 %v289
      %v341 = vunpack.c.l.b16 %v290
      %v342 = vunpack.c.l.b16 %v291
      %v343 = vunpack.c.l.b16 %v292
      %v344 = vunpack.c.l.b16 %v293
      %v345 = vunpack.c.l.b16 %v294
      %v346 = vunpack.c.l.b16 %v295
      %v347 = vunpack.c.l.b16 %v296
      %v348 = vunpack.c.l.b16 %v297
      %v349 = vunpack.c.l.b16 %v298
      %v350 = vpack.c.b16 %v335, %v334
      %v351 = vpack.c.b16 %v337, %v336
      %v352 = vpack.c.b16 %v339, %v338
      %v353 = vpack.c.b16 %v341, %v340
      %v354 = vpack.c.b16 %v343, %v342
      %v355 = vpack.c.b16 %v345, %v344
      %v356 = vpack.c.b16 %v347, %v346
      %v357 = vpack.c.b16 %v349, %v348
      %vm358 = vcmask 162816
      %v360 = vsel %vm358, %v317, 0
      %v363 = vsel %vm358, %v350, 0
      %v366 = vsel %vm358, %v351, 0
      %v369 = vsel %vm358, %v352, 0
      %v372 = vsel %vm358, %v353, 0
      %v375 = vsel %vm358, %v354, 0
      %v378 = vsel %vm358, %v355, 0
      %v381 = vsel %vm358, %v356, 0
      %v384 = vsel %vm358, %v357, 0
      %386 = vmatpush.bf16.xpose.msra.mxu0 %v384
      %387 = vmatpush.bf16.xpose.msra.mxu0 %v381
      %388 = vmatpush.bf16.xpose.msra.mxu0 %v378
      %389 = vmatpush.bf16.xpose.msra.mxu0 %v375
      %390 = vmatpush.bf16.xpose.msra.mxu0 %v372
      %391 = vmatpush.bf16.xpose.msra.mxu0 %v369
      %392 = vmatpush.bf16.xpose.msra.mxu0 %v366
      %393 = vmatpush.bf16.xpose.msra.mxu0 %v363
      %394 = vmatmul.bf16.gmra.mxu0 %v360
      %v395 = vpop.f32.mrf.mxu0
      %v396 = vadd.f32 %v306, %v395
      %v397 = vpop.f32.mrf.mxu0
      %v398 = vadd.f32 %v311, %v397
      %399 = vdwg.mxu0
      %v400 = vmax.f32 %v396, 0.0
      %v401 = vmax.f32 %v398, 0.0
      %v402 = vld [vmem:[%s3] sm:$0xf]
      %v403 = vpack.c.bf16 %v401, %v400
      %v404 = vld [vmem:[%s4] sm:$0xff]
      %406 = vset.pattern.permute.xlu0 0
      %407 = vperm.xlu0 %406, %v404
      %v408 = vpop.permute.xlu0 %407
      %vm410 = vcmask 130048
      %v412 = vsel %vm410, %v402, 0
      %414 = vmatpush.bf16.msra.mxu0 0
      %415 = vmatpush.bf16.msra.mxu0 0
      %416 = vmatpush.bf16.msra.mxu0 0
      %417 = vmatpush.bf16.msra.mxu0 0
      %418 = vmatpush.bf16.msra.mxu0 0
      %419 = vmatpush.bf16.msra.mxu0 0
      %420 = vmatpush.bf16.msra.mxu0 0
      %421 = vmatpush.bf16.msra.mxu0 %v403
      %422 = vmatmul.bf16.gmra.mxu0 %v412
      %v423 = vpop.f32.mrf.mxu0
      %v424 = vadd.f32 %v408, %v423
      %v425 = vpop.f32.mrf.mxu0
      %426 = vdwg.mxu0
      %v427 = vmax.f32 %v424, 0.0
      %v428 = vld [vmem:[%s5] sm:$0x3]
      %v429 = vpack.c.bf16 %v427, %v427
      %v430 = vld [vmem:[%s6] sm:$0xf]
      %432 = vset.pattern.permute.xlu0 0
      %433 = vperm.xlu0 %432, %v430
      %v434 = vpop.permute.xlu0 %433
      %vm436 = vcmask 64512
      %v438 = vsel %vm436, %v428, 0
      %vm440 = vcmask 1043456
      %v442 = vsel %vm440, %v429, 0
      %444 = vmatpush.bf16.msra.mxu0 0
      %445 = vmatpush.bf16.msra.mxu0 0
      %446 = vmatpush.bf16.msra.mxu0 0
      %447 = vmatpush.bf16.msra.mxu0 0
      %448 = vmatpush.bf16.msra.mxu0 0
      %449 = vmatpush.bf16.msra.mxu0 0
      %450 = vmatpush.bf16.msra.mxu0 0
      %451 = vmatpush.bf16.msra.mxu0 %v442
      %452 = vmatmul.bf16.gmra.mxu0 %v438
      %v453 = vpop.f32.mrf.mxu0
      %v454 = vadd.f32 %v434, %v453
      %v455 = vpop.f32.mrf.mxu0
      %456 = vdwg.mxu0
      %v457 = vsel %vm440, %v454, -inf
      %v458 = vrot.slane %v457, 4
      %v459 = vmax.f32 %v457, %v458
      %v460 = vrot.slane %v459, 2
      %v461 = vmax.f32 %v459, %v460
      %v462 = vrot.slane %v461, 1
      %v463 = vmax.f32 %v461, %v462
      %v464 = vsub.f32 %v454, %v463
      %v465 = vmul.f32 %v464, 1.442695
      %v466 = vpow.pop %v465
      %v467 = vsel %vm440, %v466, 0.0
      %v468 = vrot.slane %v467, 4
      %v469 = vadd.f32 %v467, %v468
      %v470 = vrot.slane %v469, 2
      %v471 = vadd.f32 %v469, %v470
      %v472 = vrot.slane %v471, 1
      %v473 = vadd.f32 %v471, %v472
      %v474 = vrcp.pop %v473
      %v475 = vmul.f32 %v473, %v474
      %v476 = vsub.f32 1.0, %v475
      %v477 = vmul.f32 %v474, %v476
      %v478 = vadd.f32 %v474, %v477
      %vm479 = vweird.f32 %v473
      %vm480 = vweird.f32 %v474
      %vm481 = vmor %vm479, %vm480
      %v482 = vsel %vm481, %v474, %v478
      %v483 = vand.u32 2147483647, %v473
      %vm484 = vcmp.eq.f32.partialorder %v483, 8.507059e+37
      %v485 = vand.u32 %v473, 2147483648
      %v486 = vor.u32 1.1754944e-38, %v485
      %v487 = vsel %vm484, %v486, %v482
      %v488 = vmul.f32 %v466, %v487
      %489 = vxpose.xlu0.b32.start [1/16] %v488, 128
      %490 = vxpose.xlu0.b32.cont [2/16] 0.0, 128
      %491 = vxpose.xlu0.b32.cont [3/16] 0.0, 128
      %492 = vxpose.xlu0.b32.cont [4/16] 0.0, 128
      %493 = vxpose.xlu0.b32.cont [5/16] 0.0, 128
      %494 = vxpose.xlu0.b32.cont [6/16] 0.0, 128
      %495 = vxpose.xlu0.b32.cont [7/16] 0.0, 128
      %496 = vxpose.xlu0.b32.cont [8/16] 0.0, 128
      %497 = vxpose.xlu0.b32.cont [9/16] 0.0, 128
      %498 = vxpose.xlu0.b32.cont [10/16] 0.0, 128
      %499 = vxpose.xlu0.b32.cont [11/16] 0.0, 128
      %500 = vxpose.xlu0.b32.cont [12/16] 0.0, 128
      %501 = vxpose.xlu0.b32.cont [13/16] 0.0, 128
      %502 = vxpose.xlu0.b32.cont [14/16] 0.0, 128
      %503 = vxpose.xlu0.b32.cont [15/16] 0.0, 128
      %504 = vxpose.xlu0.b32.end [16/16] 0.0, 128
      %v505 = vpop.trf.xlu0
      %v506 = vpop.trf.xlu0
      %v507 = vpop.trf.xlu0
      %v508 = vpop.trf.xlu0
      %v509 = vpop.trf.xlu0
      %v510 = vpop.trf.xlu0
      %v511 = vpop.trf.xlu0
      %v512 = vpop.trf.xlu0
      %v513 = vpop.trf.xlu0
      %v514 = vpop.trf.xlu0
      %v515 = vpop.trf.xlu0
      %v516 = vpop.trf.xlu0
      %v517 = vpop.trf.xlu0
      %v518 = vpop.trf.xlu0
      %v519 = vpop.trf.xlu0
      %v520 = vpop.trf.xlu0
      %vm521 = vcmask 31744
      %522 = vst.msk [vmem:[%s280] sm:$0xff] %vm521, %v505
      %523 = vst.msk [vmem:[%s280 + $0x8] sm:$0xff] %vm521, %v506
      %524 = vst.msk [vmem:[%s280 + $0x10] sm:$0xff] %vm521, %v507
      %525 = vst.msk [vmem:[%s280 + $0x18] sm:$0xff] %vm521, %v508
      %526 = vst.msk [vmem:[%s280 + $0x20] sm:$0xff] %vm521, %v509
      %527 = vst.msk [vmem:[%s280 + $0x28] sm:$0xff] %vm521, %v510
      %528 = vst.msk [vmem:[%s280 + $0x30] sm:$0xff] %vm521, %v511
      %529 = vst.msk [vmem:[%s280 + $0x38] sm:$0xff] %vm521, %v512
      %530 = vst.msk [vmem:[%s280 + $0x40] sm:$0xff] %vm521, %v513
      %531 = vst.msk [vmem:[%s280 + $0x48] sm:$0xff] %vm521, %v514
      %532 = vst.msk [vmem:[%s280 + $0x50] sm:$0xff] %vm521, %v515
      %533 = vst.msk [vmem:[%s280 + $0x58] sm:$0xff] %vm521, %v516
      %534 = vst.msk [vmem:[%s280 + $0x60] sm:$0xff] %vm521, %v517
      %535 = vst.msk [vmem:[%s280 + $0x68] sm:$0xff] %vm521, %v518
      %536 = vst.msk [vmem:[%s280 + $0x70] sm:$0xff] %vm521, %v519
      %537 = vst.msk [vmem:[%s280 + $0x78] sm:$0xff] %vm521, %v520
      %s538 = smul.u32 16, %s18
      %p539 = scmp.lt.s32.totalorder %s538, 31
      %s540 = scalar_select %p539, %s538, 31
      %s541 = smul.addr %s540, 8
      %s542 = scalar_lea.vmem %s7, %s541
      // Predicated region
      $region49: #{mlp_forward.1} parent=47 // pred_check
        %p543 = pneg %p188
      $region50: #{mlp_forward.1} parent=47 // pred_check_branch
        %545 = sbr.rel (%p543) target = $region52
      $region51: #{mlp_forward.1} parent=47 // pred_region
        %s546 = smul.u32 16, %s18
      $region52: #{mlp_forward.1} parent=47 // pred_fallthru
        _
    $region48: #{mlp_forward.1} parent=5 // pred_fallthru
      _
    %p547 = scmp.le.s32.totalorder 2, %s13
    // Predicated region
    $region53: #{mlp_forward.1} parent=5 // pred_check
      %p548 = pneg %p547
    $region54: #{mlp_forward.1} parent=5 // pred_check_branch
      %550 = sbr.rel (%p548) target = $region56
    $region55: #{mlp_forward.1} parent=5 // pred_region
      %s551 = ssub.s32 %s13, 2
      // Predicated region
      $region57: #{mlp_forward.1} parent=55 // pred_check
        %p552 = pneg %p194
      $region58: #{mlp_forward.1} parent=55 // pred_check_branch
        %554 = sbr.rel (%p552) target = $region60
      $region59: #{mlp_forward.1} parent=55 // pred_region
        %s555 = smul.u32 16, %s19
        %p556 = scmp.lt.s32.totalorder %s555, 31
        %s557 = scalar_select %p556, %s555, 31
        %s558 = smul.addr %s557, 8
        %s559 = scalar_lea.vmem %s7, %s558
      $region60: #{mlp_forward.1} parent=55 // pred_fallthru
        _
    $region56: #{mlp_forward.1} parent=5 // pred_fallthru
      _
  $region6: #{mlp_forward.1} parent=0 // loop_footer
    %s17 = sadd.s32 1, %s13
  $region7: #{mlp_forward.1} parent=0 // loop_footer_branch
    %12 = sbr.rel target = $region3
  $region8: #{mlp_forward.1} parent=0 // loop_exit
    _

</llo_original>
